<compile_context>
chip_gen: v7x
topology: tpu7x:2x2x1
jax: 0.10.0
libtpu: 0.0.40
codegen_flags: <defaults>
</compile_context>

<pallas_src>
import functools

import jax
import jax.numpy as jnp
from jax.experimental import pallas as pl
from jax.experimental.pallas import tpu as pltpu


def _round_up(v: int, m: int) -> int:
    return ((v + m - 1) // m) * m


def _resident(arr):
    """Full-array block + constant index map: DMA'd once, revisited after.

    (pipeline_mode=pl.Buffered(1) would drop the useless second buffer for
    these 11 tiny arrays; savings are a few hundred KiB so we keep the default
    double-buffered lowering path.)
    """
    return pl.BlockSpec(arr.shape, lambda i: (0,) * arr.ndim)


def _batch_tile(n: int, tile_n: int) -> int:
    """Batch tile: multiple of 8 sublanes, capped at tile_n rows, then halved
    until the grid has >=4 steps (when n allows) so v7x megacore sharding has
    work for both TensorCores."""
    tn = _round_up(max(min(int(tile_n), _round_up(int(n), 8)), 8), 8)
    while tn > 8 and pl.cdiv(int(n), tn) < 4:
        tn = _round_up(max(tn // 2, 8), 8)
    return tn


# ----------------------------------------------------------------------------
# Kernel 1: encoder only (t is None path)
#   h = relu(x @ W1 + b1) @ W2 + b2
# ----------------------------------------------------------------------------
def _encoder_kernel(x_ref, w1_ref, b1_ref, w2_ref, b2_ref, h_ref):
    x = x_ref[...].astype(jnp.float32)                               # (tn, d_x)
    h1 = jnp.maximum(
        jnp.dot(x, w1_ref[...], preferred_element_type=jnp.float32) + b1_ref[...],
        0.0,
    )                                                                # (tn, hidden)
    h_ref[...] = (
        jnp.dot(h1, w2_ref[...], preferred_element_type=jnp.float32) + b2_ref[...]
    ).astype(h_ref.dtype)                                            # (tn, rep_dim)


# ----------------------------------------------------------------------------
# Kernel 2: full forward with treatment (only y is written back)
#   h = relu(x @ W1 + b1) @ W2 + b2
#   u = relu(h @ W3h + onehot(t) @ W3t + b3)
#   y = u @ W4 + b4
# concat([h, onehot(t)]) @ W3 is split as h@W3h + onehot(t)@W3t so no lane-axis
# concatenation is needed.
# ----------------------------------------------------------------------------
def _outcome_kernel(
    x_ref, t_ref,
    w1_ref, b1_ref, w2_ref, b2_ref,
    w3h_ref, w3t_ref, b3_ref, w4_ref, b4_ref,
    y_ref,
    *, k: int,
):
    x = x_ref[...].astype(jnp.float32)                               # (tn, d_x)
    h1 = jnp.maximum(
        jnp.dot(x, w1_ref[...], preferred_element_type=jnp.float32) + b1_ref[...],
        0.0,
    )
    h = jnp.dot(h1, w2_ref[...], preferred_element_type=jnp.float32) + b2_ref[...]

    # onehot(t) @ W3t + b3 as k unrolled VPU select-accumulates.  This avoids
    # materializing a lane-sparse (tn, k) one-hot, but the serial chain scales
    # the VALU slot linearly in k while the MXU idles -- only worthwhile while
    # k (treatment classes) is small (<= ~8); beyond that prefer a one-hot
    # matmul / row gather.
    t = t_ref[...]                                                   # (tn, 1) int32
    w3t = w3t_ref[...]                                               # (k, hidden)
    t_term = b3_ref[...]                                             # (1, hidden)
    for c in range(k):                                               # k is static
        t_term = t_term + (t == c).astype(jnp.float32) * w3t[c : c + 1, :]

    u = jnp.maximum(
        jnp.dot(h, w3h_ref[...], preferred_element_type=jnp.float32) + t_term,
        0.0,
    )                                                                # (tn, hidden)
    y_ref[...] = (
        jnp.dot(u, w4_ref[...], preferred_element_type=jnp.float32) + b4_ref[...]
    ).astype(y_ref.dtype)                                            # (tn, d_y)


# ----------------------------------------------------------------------------
# Wrapper
# ----------------------------------------------------------------------------
def cacore_forward(params, x, t=None, *, tile_n: int = 2048, vmem_limit_bytes=None):
    """Pallas-backed CaCoRE.forward.

    params : dict of weights (see init_cacore_params)
    x      : (n, d_x) covariates, f32 or bf16 (bf16 halves the dominant DMA)
    t      : (n,) int treatment indices in [0, k-1], or None

    Returns h(x) of shape (n, rep_dim) when t is None, otherwise the outcome
    prediction of shape (n, d_y) — matching the PyTorch module semantics.
    """
    n, d_x = x.shape
    hidden = params["w1"].shape[1]
    rep_dim = params["w2"].shape[1]
    k = params["w3t"].shape[0]
    d_y = params["w4"].shape[1]

    tn = _batch_tile(n, tile_n)
    grid = (pl.cdiv(n, tn),)
    cparams = pltpu.CompilerParams(
        dimension_semantics=("parallel",),
        vmem_limit_bytes=vmem_limit_bytes,
    )
    x_bytes = jnp.dtype(x.dtype).itemsize

    if t is None:
        # Encoder-only kernel: no dead outcome-head compute, no y writeback.
        enc_names = ("w1", "b1", "w2", "b2")
        ce = pl.CostEstimate(
            flops=2 * n * (d_x * hidden + hidden * rep_dim),
            transcendentals=0,
            bytes_accessed=n * (d_x * x_bytes + rep_dim * 4)
            + 4 * sum(int(params[p].size) for p in enc_names),
        )
        return pl.pallas_call(
            _encoder_kernel,
            out_shape=jax.ShapeDtypeStruct((n, rep_dim), jnp.float32),
            grid=grid,
            in_specs=[
                pl.BlockSpec((tn, d_x), lambda i: (i, 0)),
                _resident(params["w1"]), _resident(params["b1"]),
                _resident(params["w2"]), _resident(params["b2"]),
            ],
            out_specs=pl.BlockSpec((tn, rep_dim), lambda i: (i, 0)),
            compiler_params=cparams,
            cost_estimate=ce,
        )(x, params["w1"], params["b1"], params["w2"], params["b2"])

    # (n,) -> (n,1) is metadata-only for a contiguous int array; no HBM pass.
    t_col = jnp.asarray(t, jnp.int32).reshape(n, 1)

    all_w_bytes = 4 * sum(int(v.size) for v in params.values())
    ce = pl.CostEstimate(
        flops=2 * n * (d_x * hidden + hidden * rep_dim
                       + rep_dim * hidden + hidden * d_y),
        transcendentals=0,
        bytes_accessed=n * (d_x * x_bytes + 4 + d_y * 4) + all_w_bytes,
    )
    return pl.pallas_call(
        functools.partial(_outcome_kernel, k=k),
        out_shape=jax.ShapeDtypeStruct((n, d_y), jnp.float32),
        grid=grid,
        in_specs=[
            pl.BlockSpec((tn, d_x), lambda i: (i, 0)),
            pl.BlockSpec((tn, 1), lambda i: (i, 0)),
            _resident(params["w1"]), _resident(params["b1"]),
            _resident(params["w2"]), _resident(params["b2"]),
            _resident(params["w3h"]), _resident(params["w3t"]), _resident(params["b3"]),
            _resident(params["w4"]), _resident(params["b4"]),
        ],
        out_specs=pl.BlockSpec((tn, d_y), lambda i: (i, 0)),
        compiler_params=cparams,
        cost_estimate=ce,
    )(
        x, t_col,
        params["w1"], params["b1"], params["w2"], params["b2"],
        params["w3h"], params["w3t"], params["b3"],
        params["w4"], params["b4"],
    )


# ----------------------------------------------------------------------------
# Deterministic parameter init (PyTorch nn.Linear-style uniform bounds).
# Weight layout: (in_features, out_features); biases as (1, out_features).
# ----------------------------------------------------------------------------
def init_cacore_params(key, d_x, d_y, k, hidden=128, rep_dim=64):
    def linear(key, fan_in, fan_out):
        kw, kb = jax.random.split(key)
        bound = 1.0 / jnp.sqrt(fan_in)
        w = jax.random.uniform(kw, (fan_in, fan_out), jnp.float32, -bound, bound)
        b = jax.random.uniform(kb, (1, fan_out), jnp.float32, -bound, bound)
        return w, b

    keys = jax.random.split(key, 4)
    w1, b1 = linear(keys[0], d_x, hidden)            # encoder layer 1
    w2, b2 = linear(keys[1], hidden, rep_dim)        # encoder layer 2
    w3, b3 = linear(keys[2], rep_dim + k, hidden)    # outcome head layer 1
    w4, b4 = linear(keys[3], hidden, d_y)            # outcome head layer 2
    return {
        "w1": w1, "b1": b1,
        "w2": w2, "b2": b2,
        "w3h": w3[:rep_dim], "w3t": w3[rep_dim:], "b3": b3,
        "w4": w4, "b4": b4,
    }


# Pure-JAX reference for verification (mirrors the PyTorch forward).
def cacore_forward_ref(params, x, t=None):
    x = x.astype(jnp.float32)
    h1 = jnp.maximum(x @ params["w1"] + params["b1"], 0.0)
    h = h1 @ params["w2"] + params["b2"]
    if t is None:
        return h
    k = params["w3t"].shape[0]
    t_oh = jax.nn.one_hot(t, k, dtype=jnp.float32)
    h_t = jnp.concatenate([h, t_oh], axis=-1)
    w3 = jnp.concatenate([params["w3h"], params["w3t"]], axis=0)
    u = jnp.maximum(h_t @ w3 + params["b3"], 0.0)
    return u @ params["w4"] + params["b4"]


if __name__ == "__main__":
    # Small shapes consistent with the module's forward signature.
    n, d_x, d_y, k = 8, 16, 4, 4
    hidden, rep_dim = 32, 16

    key = jax.random.PRNGKey(0)
    k_param, k_x, k_t = jax.random.split(key, 3)

    params = init_cacore_params(k_param, d_x, d_y, k, hidden=hidden, rep_dim=rep_dim)
    x = jax.random.normal(k_x, (n, d_x), jnp.float32)
    t = jax.random.randint(k_t, (n,), 0, k, jnp.int32)

    # forward with treatment -> outcome prediction
    y_pallas = jax.block_until_ready(cacore_forward(params, x, t))
    y_ref = cacore_forward_ref(params, x, t)
    assert y_pallas.shape == (n, d_y)
    assert jnp.allclose(y_pallas, y_ref, atol=1e-4, rtol=1e-4)

    # forward without treatment -> latent representation h(x)
    h_pallas = jax.block_until_ready(cacore_forward(params, x, None))
    h_ref = cacore_forward_ref(params, x, None)
    assert h_pallas.shape == (n, rep_dim)
    assert jnp.allclose(h_pallas, h_ref, atol=1e-4, rtol=1e-4)

    # multi-tile path with a ragged tail (no padding/slicing in the wrapper:
    # exercises pl.cdiv grid + partial last block + megacore tile shrinking)
    n2 = 300
    k_x2, k_t2 = jax.random.split(jax.random.PRNGKey(1))
    x2 = jax.random.normal(k_x2, (n2, d_x), jnp.float32)
    t2 = jax.random.randint(k_t2, (n2,), 0, k, jnp.int32)
    y2 = jax.block_until_ready(cacore_forward(params, x2, t2, tile_n=128))
    assert jnp.allclose(y2, cacore_forward_ref(params, x2, t2), atol=1e-4, rtol=1e-4)
    h2 = jax.block_until_ready(cacore_forward(params, x2, None, tile_n=128))
    assert jnp.allclose(h2, cacore_forward_ref(params, x2, None), atol=1e-4, rtol=1e-4)

    # bf16-stored covariates (halves the dominant HBM stream); compare against
    # the reference evaluated on the same bf16-rounded inputs.
    x2_bf16 = x2.astype(jnp.bfloat16)
    y2_bf16 = jax.block_until_ready(cacore_forward(params, x2_bf16, t2, tile_n=128))
    y2_bf16_ref = cacore_forward_ref(params, x2_bf16.astype(jnp.float32), t2)
    assert jnp.allclose(y2_bf16, y2_bf16_ref, atol=5e-2, rtol=5e-2)

    print("KERNEL_OK")
</pallas_src>

<mosaic_0001>
module attributes {stable_mosaic.version = 11 : i64} {
  func.func @_outcome_kernel(%arg0: i32, %arg1: memref<8x16xf32, #tpu.memory_space<vmem>>, %arg2: memref<8x1xi32, #tpu.memory_space<vmem>>, %arg3: memref<16x32xf32, #tpu.memory_space<vmem>>, %arg4: memref<1x32xf32, #tpu.memory_space<vmem>>, %arg5: memref<32x16xf32, #tpu.memory_space<vmem>>, %arg6: memref<1x16xf32, #tpu.memory_space<vmem>>, %arg7: memref<16x32xf32, #tpu.memory_space<vmem>>, %arg8: memref<4x32xf32, #tpu.memory_space<vmem>>, %arg9: memref<1x32xf32, #tpu.memory_space<vmem>>, %arg10: memref<32x4xf32, #tpu.memory_space<vmem>>, %arg11: memref<1x4xf32, #tpu.memory_space<vmem>>, %arg12: memref<8x4xf32, #tpu.memory_space<vmem>>) attributes {dimension_semantics = [#tpu.dimension_semantics<parallel>], iteration_bounds = array<i64: 1>, scalar_prefetch = 0 : i64, scratch_operands = 0 : i64, tpu.core_type = #tpu.core_type<tc>, window_params = [{transform_indices = @transform_0, window_bounds = array<i64: 8, 16>}, {transform_indices = @transform_1, window_bounds = array<i64: 8, 1>}, {pipeline_mode = #tpu.pipeline_mode<synchronous>, transform_indices = @transform_2, window_bounds = array<i64: 16, 32>}, {pipeline_mode = #tpu.pipeline_mode<synchronous>, transform_indices = @transform_3, window_bounds = array<i64: 1, 32>}, {pipeline_mode = #tpu.pipeline_mode<synchronous>, transform_indices = @transform_4, window_bounds = array<i64: 32, 16>}, {pipeline_mode = #tpu.pipeline_mode<synchronous>, transform_indices = @transform_5, window_bounds = array<i64: 1, 16>}, {pipeline_mode = #tpu.pipeline_mode<synchronous>, transform_indices = @transform_6, window_bounds = array<i64: 16, 32>}, {pipeline_mode = #tpu.pipeline_mode<synchronous>, transform_indices = @transform_7, window_bounds = array<i64: 4, 32>}, {pipeline_mode = #tpu.pipeline_mode<synchronous>, transform_indices = @transform_8, window_bounds = array<i64: 1, 32>}, {pipeline_mode = #tpu.pipeline_mode<synchronous>, transform_indices = @transform_9, window_bounds = array<i64: 32, 4>}, {pipeline_mode = #tpu.pipeline_mode<synchronous>, transform_indices = @transform_10, window_bounds = array<i64: 1, 4>}, {transform_indices = @transform_11, window_bounds = array<i64: 8, 4>}]} {
    %c0 = arith.constant 0 : index
    %c0_0 = arith.constant 0 : index
    %0 = vector.load %arg1[%c0, %c0_0] : memref<8x16xf32, #tpu.memory_space<vmem>>, vector<8x16xf32>
    %c0_1 = arith.constant 0 : index
    %c0_2 = arith.constant 0 : index
    %1 = vector.load %arg3[%c0_1, %c0_2] : memref<16x32xf32, #tpu.memory_space<vmem>>, vector<16x32xf32>
    %cst = arith.constant dense<0.000000e+00> : vector<8x32xf32>
    %2 = tpu.matmul %0, %1, %cst {dimension_numbers = #tpu.dot_dimension_numbers<[1], [0], [0], [1], [0, 0, 1, 1], [], []>} : vector<8x16xf32>, vector<16x32xf32>, vector<8x32xf32> -> vector<8x32xf32>
    %c0_3 = arith.constant 0 : index
    %c0_4 = arith.constant 0 : index
    %3 = vector.load %arg4[%c0_3, %c0_4] : memref<1x32xf32, #tpu.memory_space<vmem>>, vector<1x32xf32>
    %4 = vector.broadcast %3 : vector<1x32xf32> to vector<8x32xf32>
    %5 = arith.addf %2, %4 : vector<8x32xf32>
    %cst_5 = arith.constant 0.000000e+00 : f32
    %6 = vector.broadcast %cst_5 : f32 to vector<8x32xf32>
    %7 = arith.maximumf %5, %6 : vector<8x32xf32>
    %c0_6 = arith.constant 0 : index
    %c0_7 = arith.constant 0 : index
    %8 = vector.load %arg5[%c0_6, %c0_7] : memref<32x16xf32, #tpu.memory_space<vmem>>, vector<32x16xf32>
    %cst_8 = arith.constant dense<0.000000e+00> : vector<8x16xf32>
    %9 = tpu.matmul %7, %8, %cst_8 {dimension_numbers = #tpu.dot_dimension_numbers<[1], [0], [0], [1], [0, 0, 1, 1], [], []>} : vector<8x32xf32>, vector<32x16xf32>, vector<8x16xf32> -> vector<8x16xf32>
    %c0_9 = arith.constant 0 : index
    %c0_10 = arith.constant 0 : index
    %10 = vector.load %arg6[%c0_9, %c0_10] : memref<1x16xf32, #tpu.memory_space<vmem>>, vector<1x16xf32>
    %11 = vector.broadcast %10 : vector<1x16xf32> to vector<8x16xf32>
    %12 = arith.addf %9, %11 : vector<8x16xf32>
    %c0_11 = arith.constant 0 : index
    %c0_12 = arith.constant 0 : index
    %13 = vector.load %arg2[%c0_11, %c0_12] : memref<8x1xi32, #tpu.memory_space<vmem>>, vector<8x1xi32>
    %c0_13 = arith.constant 0 : index
    %c0_14 = arith.constant 0 : index
    %14 = vector.load %arg8[%c0_13, %c0_14] : memref<4x32xf32, #tpu.memory_space<vmem>>, vector<4x32xf32>
    %c0_15 = arith.constant 0 : index
    %c0_16 = arith.constant 0 : index
    %15 = vector.load %arg9[%c0_15, %c0_16] : memref<1x32xf32, #tpu.memory_space<vmem>>, vector<1x32xf32>
    %c0_i32 = arith.constant 0 : i32
    %16 = vector.broadcast %c0_i32 : i32 to vector<8x1xi32>
    %17 = arith.cmpi eq, %13, %16 : vector<8x1xi32>
    %18 = arith.extui %17 : vector<8x1xi1> to vector<8x1xi32>
    %19 = arith.sitofp %18 : vector<8x1xi32> to vector<8x1xf32>
    %20 = vector.extract_strided_slice %14 {offsets = [0, 0], sizes = [1, 32], strides = [1, 1]} : vector<4x32xf32> to vector<1x32xf32>
    %21 = vector.broadcast %19 : vector<8x1xf32> to vector<8x32xf32>
    %22 = vector.broadcast %20 : vector<1x32xf32> to vector<8x32xf32>
    %23 = arith.mulf %21, %22 : vector<8x32xf32>
    %24 = vector.broadcast %15 : vector<1x32xf32> to vector<8x32xf32>
    %25 = arith.addf %24, %23 : vector<8x32xf32>
    %c1_i32 = arith.constant 1 : i32
    %26 = vector.broadcast %c1_i32 : i32 to vector<8x1xi32>
    %27 = arith.cmpi eq, %13, %26 : vector<8x1xi32>
    %28 = arith.extui %27 : vector<8x1xi1> to vector<8x1xi32>
    %29 = arith.sitofp %28 : vector<8x1xi32> to vector<8x1xf32>
    %30 = vector.extract_strided_slice %14 {offsets = [1, 0], sizes = [1, 32], strides = [1, 1]} : vector<4x32xf32> to vector<1x32xf32>
    %31 = vector.broadcast %29 : vector<8x1xf32> to vector<8x32xf32>
    %32 = vector.broadcast %30 : vector<1x32xf32> to vector<8x32xf32>
    %33 = arith.mulf %31, %32 : vector<8x32xf32>
    %34 = arith.addf %25, %33 : vector<8x32xf32>
    %c2_i32 = arith.constant 2 : i32
    %35 = vector.broadcast %c2_i32 : i32 to vector<8x1xi32>
    %36 = arith.cmpi eq, %13, %35 : vector<8x1xi32>
    %37 = arith.extui %36 : vector<8x1xi1> to vector<8x1xi32>
    %38 = arith.sitofp %37 : vector<8x1xi32> to vector<8x1xf32>
    %39 = vector.extract_strided_slice %14 {offsets = [2, 0], sizes = [1, 32], strides = [1, 1]} : vector<4x32xf32> to vector<1x32xf32>
    %40 = vector.broadcast %38 : vector<8x1xf32> to vector<8x32xf32>
    %41 = vector.broadcast %39 : vector<1x32xf32> to vector<8x32xf32>
    %42 = arith.mulf %40, %41 : vector<8x32xf32>
    %43 = arith.addf %34, %42 : vector<8x32xf32>
    %c3_i32 = arith.constant 3 : i32
    %44 = vector.broadcast %c3_i32 : i32 to vector<8x1xi32>
    %45 = arith.cmpi eq, %13, %44 : vector<8x1xi32>
    %46 = arith.extui %45 : vector<8x1xi1> to vector<8x1xi32>
    %47 = arith.sitofp %46 : vector<8x1xi32> to vector<8x1xf32>
    %48 = vector.extract_strided_slice %14 {offsets = [3, 0], sizes = [1, 32], strides = [1, 1]} : vector<4x32xf32> to vector<1x32xf32>
    %49 = vector.broadcast %47 : vector<8x1xf32> to vector<8x32xf32>
    %50 = vector.broadcast %48 : vector<1x32xf32> to vector<8x32xf32>
    %51 = arith.mulf %49, %50 : vector<8x32xf32>
    %52 = arith.addf %43, %51 : vector<8x32xf32>
    %c0_17 = arith.constant 0 : index
    %c0_18 = arith.constant 0 : index
    %53 = vector.load %arg7[%c0_17, %c0_18] : memref<16x32xf32, #tpu.memory_space<vmem>>, vector<16x32xf32>
    %cst_19 = arith.constant dense<0.000000e+00> : vector<8x32xf32>
    %54 = tpu.matmul %12, %53, %cst_19 {dimension_numbers = #tpu.dot_dimension_numbers<[1], [0], [0], [1], [0, 0, 1, 1], [], []>} : vector<8x16xf32>, vector<16x32xf32>, vector<8x32xf32> -> vector<8x32xf32>
    %55 = arith.addf %54, %52 : vector<8x32xf32>
    %cst_20 = arith.constant 0.000000e+00 : f32
    %56 = vector.broadcast %cst_20 : f32 to vector<8x32xf32>
    %57 = arith.maximumf %55, %56 : vector<8x32xf32>
    %c0_21 = arith.constant 0 : index
    %c0_22 = arith.constant 0 : index
    %58 = vector.load %arg10[%c0_21, %c0_22] : memref<32x4xf32, #tpu.memory_space<vmem>>, vector<32x4xf32>
    %cst_23 = arith.constant dense<0.000000e+00> : vector<8x4xf32>
    %59 = tpu.matmul %57, %58, %cst_23 {dimension_numbers = #tpu.dot_dimension_numbers<[1], [0], [0], [1], [0, 0, 1, 1], [], []>} : vector<8x32xf32>, vector<32x4xf32>, vector<8x4xf32> -> vector<8x4xf32>
    %c0_24 = arith.constant 0 : index
    %c0_25 = arith.constant 0 : index
    %60 = vector.load %arg11[%c0_24, %c0_25] : memref<1x4xf32, #tpu.memory_space<vmem>>, vector<1x4xf32>
    %61 = vector.broadcast %60 : vector<1x4xf32> to vector<8x4xf32>
    %62 = arith.addf %59, %61 : vector<8x4xf32>
    %c0_26 = arith.constant 0 : index
    %c0_27 = arith.constant 0 : index
    %63 = vector.load %arg12[%c0_26, %c0_27] : memref<8x4xf32, #tpu.memory_space<vmem>>, vector<8x4xf32>
    tpu.vector_store %arg12[%c0_26, %c0_27], %62 {strides = array<i32>} : memref<8x4xf32, #tpu.memory_space<vmem>>, vector<8x4xf32>,
    return
  }
  func.func @transform_0(%arg0: i32) -> (i32, i32) {
    %c0_i32 = arith.constant 0 : i32
    %c0_i32_0 = arith.constant 0 : i32
    return %arg0, %c0_i32 : i32, i32
  }
  func.func @transform_1(%arg0: i32) -> (i32, i32) {
    %c0_i32 = arith.constant 0 : i32
    %c0_i32_0 = arith.constant 0 : i32
    return %arg0, %c0_i32 : i32, i32
  }
  func.func @transform_2(%arg0: i32) -> (i32, i32) {
    %c0_i32 = arith.constant 0 : i32
    %c0_i32_0 = arith.constant 0 : i32
    %c0_i32_1 = arith.constant 0 : i32
    return %c0_i32, %c0_i32_0 : i32, i32
  }
  func.func @transform_3(%arg0: i32) -> (i32, i32) {
    %c0_i32 = arith.constant 0 : i32
    %c0_i32_0 = arith.constant 0 : i32
    %c0_i32_1 = arith.constant 0 : i32
    return %c0_i32, %c0_i32_0 : i32, i32
  }
  func.func @transform_4(%arg0: i32) -> (i32, i32) {
    %c0_i32 = arith.constant 0 : i32
    %c0_i32_0 = arith.constant 0 : i32
    %c0_i32_1 = arith.constant 0 : i32
    return %c0_i32, %c0_i32_0 : i32, i32
  }
  func.func @transform_5(%arg0: i32) -> (i32, i32) {
    %c0_i32 = arith.constant 0 : i32
    %c0_i32_0 = arith.constant 0 : i32
    %c0_i32_1 = arith.constant 0 : i32
    return %c0_i32, %c0_i32_0 : i32, i32
  }
  func.func @transform_6(%arg0: i32) -> (i32, i32) {
    %c0_i32 = arith.constant 0 : i32
    %c0_i32_0 = arith.constant 0 : i32
    %c0_i32_1 = arith.constant 0 : i32
    return %c0_i32, %c0_i32_0 : i32, i32
  }
  func.func @transform_7(%arg0: i32) -> (i32, i32) {
    %c0_i32 = arith.constant 0 : i32
    %c0_i32_0 = arith.constant 0 : i32
    %c0_i32_1 = arith.constant 0 : i32
    return %c0_i32, %c0_i32_0 : i32, i32
  }
  func.func @transform_8(%arg0: i32) -> (i32, i32) {
    %c0_i32 = arith.constant 0 : i32
    %c0_i32_0 = arith.constant 0 : i32
    %c0_i32_1 = arith.constant 0 : i32
    return %c0_i32, %c0_i32_0 : i32, i32
  }
  func.func @transform_9(%arg0: i32) -> (i32, i32) {
    %c0_i32 = arith.constant 0 : i32
    %c0_i32_0 = arith.constant 0 : i32
    %c0_i32_1 = arith.constant 0 : i32
    return %c0_i32, %c0_i32_0 : i32, i32
  }
  func.func @transform_10(%arg0: i32) -> (i32, i32) {
    %c0_i32 = arith.constant 0 : i32
    %c0_i32_0 = arith.constant 0 : i32
    %c0_i32_1 = arith.constant 0 : i32
    return %c0_i32, %c0_i32_0 : i32, i32
  }
  func.func @transform_11(%arg0: i32) -> (i32, i32) {
    %c0_i32 = arith.constant 0 : i32
    %c0_i32_0 = arith.constant 0 : i32
    return %arg0, %c0_i32 : i32, i32
  }
}

</mosaic_0001>

<llo_original>
// kernel: tpu_custom_call.1
$region0: #{tpu_custom_call.1}
  #allocation0 [shape = 'u32[]', space=smem, size = 0x4, offset = 0x4, fixed_abs, tag = 'smem constant byte address 0x4 - core index']
  #allocation1 [shape = 'u32[144,128]{1,0:T(1,128)}', space=vmem, size = 0x12000, scoped, tag = 'internal scratch']
  %s0 = inlined_call_operand.vmem [shape: f32[8,16], index: 0, kind: input, shape index: {}]
  %s1 = inlined_call_operand.vmem [shape: s32[8,1], index: 1, kind: input, shape index: {}]
  %s2 = inlined_call_operand.vmem [shape: f32[16,32], index: 2, kind: input, shape index: {}]
  %s3 = inlined_call_operand.vmem [shape: f32[1,32], index: 3, kind: input, shape index: {}]
  %s4 = inlined_call_operand.vmem [shape: f32[32,16], index: 4, kind: input, shape index: {}]
  %s5 = inlined_call_operand.vmem [shape: f32[1,16], index: 5, kind: input, shape index: {}]
  %s6 = inlined_call_operand.vmem [shape: f32[16,32], index: 6, kind: input, shape index: {}]
  %s7 = inlined_call_operand.vmem [shape: f32[4,32], index: 7, kind: input, shape index: {}]
  %s8 = inlined_call_operand.vmem [shape: f32[1,32], index: 8, kind: input, shape index: {}]
  %s9 = inlined_call_operand.vmem [shape: f32[32,4], index: 9, kind: input, shape index: {}]
  %s10 = inlined_call_operand.vmem [shape: f32[1,4], index: 10, kind: input, shape index: {}]
  %s11 = inlined_call_operand.vmem [shape: f32[8,4], index: 11, kind: output, shape index: {}]
  %s12 = sld [smem:[#allocation0]]
  $region54: #{tpu_custom_call.1} parent=0
    _
  %s14 = ssub.s32 1, %s12
  %s15 = scalar_select 0, %s14, %s12
  // Predicated region
  $region2: #{tpu_custom_call.1} parent=0 // pred_check
    _
  $region3: #{tpu_custom_call.1} parent=0 // pred_check_branch
    %17 = sbr.rel (0) target = $region5
  $region4: #{tpu_custom_call.1} parent=0 // pred_region
    _
  $region5: #{tpu_custom_call.1} parent=0 // pred_fallthru
    _
  // Predicated region
  $region6: #{tpu_custom_call.1} parent=0 // pred_check
    _
  $region7: #{tpu_custom_call.1} parent=0 // pred_check_branch
    %19 = sbr.rel (0) target = $region9
  $region8: #{tpu_custom_call.1} parent=0 // pred_region
    _
  $region9: #{tpu_custom_call.1} parent=0 // pred_fallthru
    _
  // Predicated region
  $region10: #{tpu_custom_call.1} parent=0 // pred_check
    _
  $region11: #{tpu_custom_call.1} parent=0 // pred_check_branch
    %21 = sbr.rel (0) target = $region13
  $region12: #{tpu_custom_call.1} parent=0 // pred_region
    _
  $region13: #{tpu_custom_call.1} parent=0 // pred_fallthru
    _
  // Predicated region
  $region14: #{tpu_custom_call.1} parent=0 // pred_check
    _
  $region15: #{tpu_custom_call.1} parent=0 // pred_check_branch
    %23 = sbr.rel (0) target = $region17
  $region16: #{tpu_custom_call.1} parent=0 // pred_region
    _
  $region17: #{tpu_custom_call.1} parent=0 // pred_fallthru
    _
  // Predicated region
  $region18: #{tpu_custom_call.1} parent=0 // pred_check
    _
  $region19: #{tpu_custom_call.1} parent=0 // pred_check_branch
    %25 = sbr.rel (0) target = $region21
  $region20: #{tpu_custom_call.1} parent=0 // pred_region
    _
  $region21: #{tpu_custom_call.1} parent=0 // pred_fallthru
    _
  // Predicated region
  $region22: #{tpu_custom_call.1} parent=0 // pred_check
    _
  $region23: #{tpu_custom_call.1} parent=0 // pred_check_branch
    %27 = sbr.rel (0) target = $region25
  $region24: #{tpu_custom_call.1} parent=0 // pred_region
    _
  $region25: #{tpu_custom_call.1} parent=0 // pred_fallthru
    _
  // Predicated region
  $region26: #{tpu_custom_call.1} parent=0 // pred_check
    _
  $region27: #{tpu_custom_call.1} parent=0 // pred_check_branch
    %29 = sbr.rel (0) target = $region29
  $region28: #{tpu_custom_call.1} parent=0 // pred_region
    _
  $region29: #{tpu_custom_call.1} parent=0 // pred_fallthru
    _
  // Predicated region
  $region30: #{tpu_custom_call.1} parent=0 // pred_check
    _
  $region31: #{tpu_custom_call.1} parent=0 // pred_check_branch
    %31 = sbr.rel (0) target = $region33
  $region32: #{tpu_custom_call.1} parent=0 // pred_region
    _
  $region33: #{tpu_custom_call.1} parent=0 // pred_fallthru
    _
  // Predicated region
  $region34: #{tpu_custom_call.1} parent=0 // pred_check
    _
  $region35: #{tpu_custom_call.1} parent=0 // pred_check_branch
    %33 = sbr.rel (0) target = $region37
  $region36: #{tpu_custom_call.1} parent=0 // pred_region
    _
  $region37: #{tpu_custom_call.1} parent=0 // pred_fallthru
    _
  // Predicated region
  $region38: #{tpu_custom_call.1} parent=0 // pred_check
    _
  $region39: #{tpu_custom_call.1} parent=0 // pred_check_branch
    %35 = sbr.rel (0) target = $region41
  $region40: #{tpu_custom_call.1} parent=0 // pred_region
    _
  $region41: #{tpu_custom_call.1} parent=0 // pred_fallthru
    _
  // Predicated region
  $region42: #{tpu_custom_call.1} parent=0 // pred_check
    _
  $region43: #{tpu_custom_call.1} parent=0 // pred_check_branch
    %37 = sbr.rel (0) target = $region45
  $region44: #{tpu_custom_call.1} parent=0 // pred_region
    _
  $region45: #{tpu_custom_call.1} parent=0 // pred_fallthru
    _
  %v38 = vld [vmem:[%s0] sm:$0xff]
  %v39 = vld [vmem:[%s2] sm:$0xff]
  %v40 = vld [vmem:[%s2 + $0x8] sm:$0xff]
  %v41 = vld [vmem:[%s3] sm:$0x1]
  %v43 = vlaneseq
  %v44 = vshrl.u32 %v43, 7
  %v45 = vsub.s32 0, %v44
  %v46 = vrot.slane %v41, %v45
  %vm48 = vcmask 130048
  %v50 = vsel %vm48, %v38, 0
  %52 = vmatprep.subr.mxu0 0.0
  %53 = vmatpush1.msra.mxu0 %v39
  %54 = vmatprep.subr.mxu0 0.0
  %55 = vmatpush1.msra.mxu0 %v40
  %56 = vmatprep.subr.mxu0 0.0
  %57 = vmatpush1.msra.mxu0 0.0
  %58 = vmatprep.subr.mxu0 0.0
  %59 = vmatpush1.msra.mxu0 0.0
  %60 = vmatprep.subr.mxu0 0.0
  %61 = vmatpush1.msra.mxu0 0.0
  %62 = vmatprep.subr.mxu0 0.0
  %63 = vmatpush1.msra.mxu0 0.0
  %64 = vmatprep.subr.mxu0 0.0
  %65 = vmatpush1.msra.mxu0 0.0
  %66 = vmatprep.subr.mxu0 0.0
  %67 = vmatpush1.msra.mxu0 0.0
  %68 = vmatprep.subr.mxu0 0.0
  %69 = vmatpush1.msra.mxu0 0.0
  %70 = vmatprep.subr.mxu0 0.0
  %71 = vmatpush1.msra.mxu0 0.0
  %72 = vmatprep.subr.mxu0 0.0
  %73 = vmatpush1.msra.mxu0 0.0
  %74 = vmatprep.subr.mxu0 0.0
  %75 = vmatpush1.msra.mxu0 0.0
  %76 = vmatprep.subr.mxu0 0.0
  %77 = vmatpush1.msra.mxu0 0.0
  %78 = vmatprep.subr.mxu0 0.0
  %79 = vmatpush1.msra.mxu0 0.0
  %80 = vmatprep.subr.mxu0 0.0
  %81 = vmatpush1.msra.mxu0 0.0
  %82 = vmatprep.subr.mxu0 0.0
  %83 = vmatpush1.msra.mxu0 0.0
  %84 = vmatprep.subr.mxu0 0.0
  %85 = vmatpush1.msra.mxu0 0.0
  %86 = vmatprep.subr.mxu0 0.0
  %87 = vmatpush1.msra.mxu0 0.0
  %88 = vmatprep.subr.mxu0 0.0
  %89 = vmatpush1.msra.mxu0 0.0
  %90 = vmatprep.subr.mxu0 0.0
  %91 = vmatpush1.msra.mxu0 0.0
  %92 = vmatprep.subr.mxu0 0.0
  %93 = vmatpush1.msra.mxu0 0.0
  %94 = vmatprep.subr.mxu0 0.0
  %95 = vmatpush1.msra.mxu0 0.0
  %96 = vmatprep.subr.mxu0 0.0
  %97 = vmatpush1.msra.mxu0 0.0
  %98 = vmatprep.subr.mxu0 0.0
  %99 = vmatpush1.msra.mxu0 0.0
  %100 = vmatprep.subr.mxu0 0.0
  %101 = vmatpush1.msra.mxu0 0.0
  %102 = vmatprep.subr.mxu0 0.0
  %103 = vmatpush1.msra.mxu0 0.0
  %104 = vmatprep.subr.mxu0 0.0
  %105 = vmatpush1.msra.mxu0 0.0
  %106 = vmatprep.subr.mxu0 0.0
  %107 = vmatpush1.msra.mxu0 0.0
  %108 = vmatprep.subr.mxu0 0.0
  %109 = vmatpush1.msra.mxu0 0.0
  %110 = vmatprep.subr.mxu0 0.0
  %111 = vmatpush1.msra.mxu0 0.0
  %112 = vmatprep.subr.mxu0 0.0
  %113 = vmatpush1.msra.mxu0 0.0
  %114 = vmatprep.subr.mxu0 0.0
  %115 = vmatpush1.msra.mxu0 0.0
  %116 = vmatprep.mubr.f32.mxu0 0.0
  %117 = vmatmul.mubr.f32.gmra.mrb[0].mxu0 %v50
  %v118 = vpop.f32.mrb[0].mxu0
  %v119 = vadd.f32 %v46, %v118
  %v120 = vpop.f32.mrb[0].mxu0
  %121 = vdwg.mxu0
  %v122 = vmax.f32 %v119, 0.0
  %v123 = vld [vmem:[%s4] sm:$0xff]
  %v124 = vld [vmem:[%s4 + $0x8] sm:$0xff]
  %v125 = vld [vmem:[%s4 + $0x10] sm:$0xff]
  %v126 = vld [vmem:[%s4 + $0x18] sm:$0xff]
  %v127 = vld [vmem:[%s5] sm:$0x1]
  %v129 = vlaneseq
  %v130 = vshrl.u32 %v129, 7
  %v131 = vsub.s32 0, %v130
  %v132 = vrot.slane %v127, %v131
  %vm134 = vcmask 261120
  %v136 = vsel %vm134, %v122, 0
  %138 = vmatprep.subr.mxu0 0.0
  %139 = vmatpush1.msra.mxu0 %v123
  %140 = vmatprep.subr.mxu0 0.0
  %141 = vmatpush1.msra.mxu0 %v124
  %142 = vmatprep.subr.mxu0 0.0
  %143 = vmatpush1.msra.mxu0 %v125
  %144 = vmatprep.subr.mxu0 0.0
  %145 = vmatpush1.msra.mxu0 %v126
  %146 = vmatprep.subr.mxu0 0.0
  %147 = vmatpush1.msra.mxu0 0.0
  %148 = vmatprep.subr.mxu0 0.0
  %149 = vmatpush1.msra.mxu0 0.0
  %150 = vmatprep.subr.mxu0 0.0
  %151 = vmatpush1.msra.mxu0 0.0
  %152 = vmatprep.subr.mxu0 0.0
  %153 = vmatpush1.msra.mxu0 0.0
  %154 = vmatprep.subr.mxu0 0.0
  %155 = vmatpush1.msra.mxu0 0.0
  %156 = vmatprep.subr.mxu0 0.0
  %157 = vmatpush1.msra.mxu0 0.0
  %158 = vmatprep.subr.mxu0 0.0
  %159 = vmatpush1.msra.mxu0 0.0
  %160 = vmatprep.subr.mxu0 0.0
  %161 = vmatpush1.msra.mxu0 0.0
  %162 = vmatprep.subr.mxu0 0.0
  %163 = vmatpush1.msra.mxu0 0.0
  %164 = vmatprep.subr.mxu0 0.0
  %165 = vmatpush1.msra.mxu0 0.0
  %166 = vmatprep.subr.mxu0 0.0
  %167 = vmatpush1.msra.mxu0 0.0
  %168 = vmatprep.subr.mxu0 0.0
  %169 = vmatpush1.msra.mxu0 0.0
  %170 = vmatprep.subr.mxu0 0.0
  %171 = vmatpush1.msra.mxu0 0.0
  %172 = vmatprep.subr.mxu0 0.0
  %173 = vmatpush1.msra.mxu0 0.0
  %174 = vmatprep.subr.mxu0 0.0
  %175 = vmatpush1.msra.mxu0 0.0
  %176 = vmatprep.subr.mxu0 0.0
  %177 = vmatpush1.msra.mxu0 0.0
  %178 = vmatprep.subr.mxu0 0.0
  %179 = vmatpush1.msra.mxu0 0.0
  %180 = vmatprep.subr.mxu0 0.0
  %181 = vmatpush1.msra.mxu0 0.0
  %182 = vmatprep.subr.mxu0 0.0
  %183 = vmatpush1.msra.mxu0 0.0
  %184 = vmatprep.subr.mxu0 0.0
  %185 = vmatpush1.msra.mxu0 0.0
  %186 = vmatprep.subr.mxu0 0.0
  %187 = vmatpush1.msra.mxu0 0.0
  %188 = vmatprep.subr.mxu0 0.0
  %189 = vmatpush1.msra.mxu0 0.0
  %190 = vmatprep.subr.mxu0 0.0
  %191 = vmatpush1.msra.mxu0 0.0
  %192 = vmatprep.subr.mxu0 0.0
  %193 = vmatpush1.msra.mxu0 0.0
  %194 = vmatprep.subr.mxu0 0.0
  %195 = vmatpush1.msra.mxu0 0.0
  %196 = vmatprep.subr.mxu0 0.0
  %197 = vmatpush1.msra.mxu0 0.0
  %198 = vmatprep.subr.mxu0 0.0
  %199 = vmatpush1.msra.mxu0 0.0
  %200 = vmatprep.subr.mxu0 0.0
  %201 = vmatpush1.msra.mxu0 0.0
  %202 = vmatprep.mubr.f32.mxu0 0.0
  %203 = vmatmul.mubr.f32.gmra.mrb[0].mxu0 %v136
  %v204 = vpop.f32.mrb[0].mxu0
  %v205 = vadd.f32 %v132, %v204
  %v206 = vpop.f32.mrb[0].mxu0
  %207 = vdwg.mxu0
  %v208 = vld [vmem:[%s1] sm:$0xff]
  %v209 = vld [vmem:[%s7] sm:$0xf]
  %v210 = vld [vmem:[%s8] sm:$0x1]
  %vm211 = vcmp.eq.s32.totalorder %v208, 0
  %v212 = vsel %vm211, 1, 0
  %v213 = vcvt.s32.f32 %v212
  %215 = vset.pattern.permute.xlu0 0
  %216 = vperm.xlu0 %215, %v213
  %v217 = vpop.permute.xlu0 %216
  %v219 = vlaneseq
  %v220 = vshrl.u32 %v219, 7
  %v221 = vsub.s32 0, %v220
  %v222 = vrot.slane %v209, %v221
  %v223 = vmul.f32 %v217, %v222
  %v225 = vlaneseq
  %v226 = vshrl.u32 %v225, 7
  %v227 = vsub.s32 0, %v226
  %v228 = vrot.slane %v210, %v227
  %v230 = vadd.f32 %v228, %v223
  %vm231 = vcmp.eq.s32.totalorder %v208, 1
  %v232 = vsel %vm231, 1, 0
  %v233 = vcvt.s32.f32 %v232
  %235 = vset.pattern.permute.xlu0 0
  %236 = vperm.xlu0 %235, %v233
  %v237 = vpop.permute.xlu0 %236
  %v239 = vlaneseq
  %v240 = vshrl.u32 %v239, 7
  %v241 = vsub.s32 1, %v240
  %v242 = vrot.slane %v209, %v241
  %v243 = vmul.f32 %v237, %v242
  %v244 = vadd.f32 %v230, %v243
  %vm245 = vcmp.eq.s32.totalorder %v208, 2
  %v246 = vsel %vm245, 1, 0
  %v247 = vcvt.s32.f32 %v246
  %249 = vset.pattern.permute.xlu0 0
  %250 = vperm.xlu0 %249, %v247
  %v251 = vpop.permute.xlu0 %250
  %v253 = vlaneseq
  %v254 = vshrl.u32 %v253, 7
  %v255 = vsub.s32 2, %v254
  %v256 = vrot.slane %v209, %v255
  %v257 = vmul.f32 %v251, %v256
  %v258 = vadd.f32 %v244, %v257
  %vm259 = vcmp.eq.s32.totalorder %v208, 3
  %v260 = vsel %vm259, 1, 0
  %v261 = vcvt.s32.f32 %v260
  %263 = vset.pattern.permute.xlu0 0
  %264 = vperm.xlu0 %263, %v261
  %v265 = vpop.permute.xlu0 %264
  %v267 = vlaneseq
  %v268 = vshrl.u32 %v267, 7
  %v269 = vsub.s32 3, %v268
  %v270 = vrot.slane %v209, %v269
  %v271 = vmul.f32 %v265, %v270
  %v272 = vadd.f32 %v258, %v271
  %v273 = vld [vmem:[%s6] sm:$0xff]
  %v274 = vld [vmem:[%s6 + $0x8] sm:$0xff]
  %v276 = vsel %vm48, %v205, 0
  %278 = vmatprep.subr.mxu0 0.0
  %279 = vmatpush1.msra.mxu0 %v273
  %280 = vmatprep.subr.mxu0 0.0
  %281 = vmatpush1.msra.mxu0 %v274
  %282 = vmatprep.subr.mxu0 0.0
  %283 = vmatpush1.msra.mxu0 0.0
  %284 = vmatprep.subr.mxu0 0.0
  %285 = vmatpush1.msra.mxu0 0.0
  %286 = vmatprep.subr.mxu0 0.0
  %287 = vmatpush1.msra.mxu0 0.0
  %288 = vmatprep.subr.mxu0 0.0
  %289 = vmatpush1.msra.mxu0 0.0
  %290 = vmatprep.subr.mxu0 0.0
  %291 = vmatpush1.msra.mxu0 0.0
  %292 = vmatprep.subr.mxu0 0.0
  %293 = vmatpush1.msra.mxu0 0.0
  %294 = vmatprep.subr.mxu0 0.0
  %295 = vmatpush1.msra.mxu0 0.0
  %296 = vmatprep.subr.mxu0 0.0
  %297 = vmatpush1.msra.mxu0 0.0
  %298 = vmatprep.subr.mxu0 0.0
  %299 = vmatpush1.msra.mxu0 0.0
  %300 = vmatprep.subr.mxu0 0.0
  %301 = vmatpush1.msra.mxu0 0.0
  %302 = vmatprep.subr.mxu0 0.0
  %303 = vmatpush1.msra.mxu0 0.0
  %304 = vmatprep.subr.mxu0 0.0
  %305 = vmatpush1.msra.mxu0 0.0
  %306 = vmatprep.subr.mxu0 0.0
  %307 = vmatpush1.msra.mxu0 0.0
  %308 = vmatprep.subr.mxu0 0.0
  %309 = vmatpush1.msra.mxu0 0.0
  %310 = vmatprep.subr.mxu0 0.0
  %311 = vmatpush1.msra.mxu0 0.0
  %312 = vmatprep.subr.mxu0 0.0
  %313 = vmatpush1.msra.mxu0 0.0
  %314 = vmatprep.subr.mxu0 0.0
  %315 = vmatpush1.msra.mxu0 0.0
  %316 = vmatprep.subr.mxu0 0.0
  %317 = vmatpush1.msra.mxu0 0.0
  %318 = vmatprep.subr.mxu0 0.0
  %319 = vmatpush1.msra.mxu0 0.0
  %320 = vmatprep.subr.mxu0 0.0
  %321 = vmatpush1.msra.mxu0 0.0
  %322 = vmatprep.subr.mxu0 0.0
  %323 = vmatpush1.msra.mxu0 0.0
  %324 = vmatprep.subr.mxu0 0.0
  %325 = vmatpush1.msra.mxu0 0.0
  %326 = vmatprep.subr.mxu0 0.0
  %327 = vmatpush1.msra.mxu0 0.0
  %328 = vmatprep.subr.mxu0 0.0
  %329 = vmatpush1.msra.mxu0 0.0
  %330 = vmatprep.subr.mxu0 0.0
  %331 = vmatpush1.msra.mxu0 0.0
  %332 = vmatprep.subr.mxu0 0.0
  %333 = vmatpush1.msra.mxu0 0.0
  %334 = vmatprep.subr.mxu0 0.0
  %335 = vmatpush1.msra.mxu0 0.0
  %336 = vmatprep.subr.mxu0 0.0
  %337 = vmatpush1.msra.mxu0 0.0
  %338 = vmatprep.subr.mxu0 0.0
  %339 = vmatpush1.msra.mxu0 0.0
  %340 = vmatprep.subr.mxu0 0.0
  %341 = vmatpush1.msra.mxu0 0.0
  %342 = vmatprep.mubr.f32.mxu0 0.0
  %343 = vmatmul.mubr.f32.gmra.mrb[0].mxu0 %v276
  %v344 = vpop.f32.mrb[0].mxu0
  %v345 = vadd.f32 %v272, %v344
  %v346 = vpop.f32.mrb[0].mxu0
  %347 = vdwg.mxu0
  %v348 = vmax.f32 %v345, 0.0
  %v349 = vld [vmem:[%s9] sm:$0xff]
  %v350 = vld [vmem:[%s9 + $0x8] sm:$0xff]
  %v351 = vld [vmem:[%s9 + $0x10] sm:$0xff]
  %v352 = vld [vmem:[%s9 + $0x18] sm:$0xff]
  %v353 = vld [vmem:[%s10] sm:$0x1]
  %v355 = vlaneseq
  %v356 = vshrl.u32 %v355, 7
  %v357 = vsub.s32 0, %v356
  %v358 = vrot.slane %v353, %v357
  %v361 = vsel %vm134, %v348, 0
  %363 = vmatprep.subr.mxu0 0.0
  %364 = vmatpush1.msra.mxu0 %v349
  %365 = vmatprep.subr.mxu0 0.0
  %366 = vmatpush1.msra.mxu0 %v350
  %367 = vmatprep.subr.mxu0 0.0
  %368 = vmatpush1.msra.mxu0 %v351
  %369 = vmatprep.subr.mxu0 0.0
  %370 = vmatpush1.msra.mxu0 %v352
  %371 = vmatprep.subr.mxu0 0.0
  %372 = vmatpush1.msra.mxu0 0.0
  %373 = vmatprep.subr.mxu0 0.0
  %374 = vmatpush1.msra.mxu0 0.0
  %375 = vmatprep.subr.mxu0 0.0
  %376 = vmatpush1.msra.mxu0 0.0
  %377 = vmatprep.subr.mxu0 0.0
  %378 = vmatpush1.msra.mxu0 0.0
  %379 = vmatprep.subr.mxu0 0.0
  %380 = vmatpush1.msra.mxu0 0.0
  %381 = vmatprep.subr.mxu0 0.0
  %382 = vmatpush1.msra.mxu0 0.0
  %383 = vmatprep.subr.mxu0 0.0
  %384 = vmatpush1.msra.mxu0 0.0
  %385 = vmatprep.subr.mxu0 0.0
  %386 = vmatpush1.msra.mxu0 0.0
  %387 = vmatprep.subr.mxu0 0.0
  %388 = vmatpush1.msra.mxu0 0.0
  %389 = vmatprep.subr.mxu0 0.0
  %390 = vmatpush1.msra.mxu0 0.0
  %391 = vmatprep.subr.mxu0 0.0
  %392 = vmatpush1.msra.mxu0 0.0
  %393 = vmatprep.subr.mxu0 0.0
  %394 = vmatpush1.msra.mxu0 0.0
  %395 = vmatprep.subr.mxu0 0.0
  %396 = vmatpush1.msra.mxu0 0.0
  %397 = vmatprep.subr.mxu0 0.0
  %398 = vmatpush1.msra.mxu0 0.0
  %399 = vmatprep.subr.mxu0 0.0
  %400 = vmatpush1.msra.mxu0 0.0
  %401 = vmatprep.subr.mxu0 0.0
  %402 = vmatpush1.msra.mxu0 0.0
  %403 = vmatprep.subr.mxu0 0.0
  %404 = vmatpush1.msra.mxu0 0.0
  %405 = vmatprep.subr.mxu0 0.0
  %406 = vmatpush1.msra.mxu0 0.0
  %407 = vmatprep.subr.mxu0 0.0
  %408 = vmatpush1.msra.mxu0 0.0
  %409 = vmatprep.subr.mxu0 0.0
  %410 = vmatpush1.msra.mxu0 0.0
  %411 = vmatprep.subr.mxu0 0.0
  %412 = vmatpush1.msra.mxu0 0.0
  %413 = vmatprep.subr.mxu0 0.0
  %414 = vmatpush1.msra.mxu0 0.0
  %415 = vmatprep.subr.mxu0 0.0
  %416 = vmatpush1.msra.mxu0 0.0
  %417 = vmatprep.subr.mxu0 0.0
  %418 = vmatpush1.msra.mxu0 0.0
  %419 = vmatprep.subr.mxu0 0.0
  %420 = vmatpush1.msra.mxu0 0.0
  %421 = vmatprep.subr.mxu0 0.0
  %422 = vmatpush1.msra.mxu0 0.0
  %423 = vmatprep.subr.mxu0 0.0
  %424 = vmatpush1.msra.mxu0 0.0
  %425 = vmatprep.subr.mxu0 0.0
  %426 = vmatpush1.msra.mxu0 0.0
  %427 = vmatprep.mubr.f32.mxu0 0.0
  %428 = vmatmul.mubr.f32.gmra.mrb[0].mxu0 %v361
  %v429 = vpop.f32.mrb[0].mxu0
  %v430 = vadd.f32 %v358, %v429
  %v431 = vpop.f32.mrb[0].mxu0
  %432 = vdwg.mxu0
  %vm433 = vcmask 31744
  %434 = vst.msk [vmem:[%s11] sm:$0xff] %vm433, %v430
  // Predicated region
  $region46: #{tpu_custom_call.1} parent=0 // pred_check
    _
  $region47: #{tpu_custom_call.1} parent=0 // pred_check_branch
    %436 = sbr.rel (0) target = $region49
  $region48: #{tpu_custom_call.1} parent=0 // pred_region
    _
  $region49: #{tpu_custom_call.1} parent=0 // pred_fallthru
    _
  // Predicated region
  $region50: #{tpu_custom_call.1} parent=0 // pred_check
    _
  $region51: #{tpu_custom_call.1} parent=0 // pred_check_branch
    %438 = sbr.rel (0) target = $region53
  $region52: #{tpu_custom_call.1} parent=0 // pred_region
    _
  $region53: #{tpu_custom_call.1} parent=0 // pred_fallthru
    _

</llo_original>
